<compile_context>
chip_gen: v6e
topology: v6e:2x2x1
jax: 0.10.0
libtpu: 0.0.40
codegen_flags: <defaults>
</compile_context>

<pallas_src>
import functools

import jax
import jax.numpy as jnp
from jax import lax
from jax.experimental import pallas as pl
from jax.experimental.pallas import tpu as pltpu

LN_EPS = 1e-5  # PyTorch nn.LayerNorm default


def _segment_mean(v, lanes, seg_len, lane_len):
    """Mean over contiguous `seg_len`-lane segments of the last axis, broadcast
    back to every lane of its segment.

    XOR-butterfly of pltpu.roll + select + add: the reduction uses XLU/VPU
    slots (idle here) instead of adding f32 matmul passes to the MXU path, and
    it is exact f32.  Requires seg_len to be a power of two (guaranteed since
    seg_len divides 128)."""
    d = seg_len // 2
    while d >= 1:
        fwd = pltpu.roll(v, shift=d, axis=v.ndim - 1)             # lane i <- lane i-d
        bwd = pltpu.roll(v, shift=lane_len - d, axis=v.ndim - 1)  # lane i <- lane i+d
        v = v + jnp.where((lanes & d) != 0, fwd, bwd)             # partner = lane ^ d
        d //= 2
    return v * (1.0 / seg_len)


def _linres_packed_kernel(x_ref, w1_ref, b1_ref, w2_ref, b2_ref, g_ref, be_ref,
                          o_ref, *, feat, packed_feat, mm_dtype):
    """One row tile of LayerNorm(x + Lin2(ReLU(Lin1(x)))) on lane-packed rows.

    x_ref/o_ref: (TM, packed_feat); each 128-lane row holds `pack` logical rows
    of `feat` features.  w1/w2 are block-diagonal packed weights."""
    x_nat = x_ref[...]                                   # native dtype -> MXU feed

    # Linear(inp -> hid) + ReLU  (bf16/f32 operands, f32 accumulation)
    h = jnp.dot(x_nat, w1_ref[...], preferred_element_type=jnp.float32)
    h = jnp.maximum(h + b1_ref[...].astype(jnp.float32), 0.0)

    # Linear(hid -> inp)  (feed MXU in the weight dtype again)
    y = jnp.dot(h.astype(mm_dtype), w2_ref[...], preferred_element_type=jnp.float32)
    y = y + b2_ref[...].astype(jnp.float32)

    # Residual + per-segment (= per logical row) LayerNorm, all in f32.
    r = x_nat.astype(jnp.float32) + y
    lanes = lax.broadcasted_iota(jnp.int32, r.shape, r.ndim - 1)   # hoisted once
    mean = _segment_mean(r, lanes, feat, packed_feat)
    cent = r - mean
    var = _segment_mean(cent * cent, lanes, feat, packed_feat)
    normed = cent * lax.rsqrt(var + LN_EPS)
    o_ref[...] = (normed * g_ref[...].astype(jnp.float32)
                  + be_ref[...].astype(jnp.float32)).astype(o_ref.dtype)


def _linres_rowtile_kernel(x_ref, w1_ref, b1_ref, w2_ref, b2_ref, g_ref, be_ref,
                           o_ref, *, mm_dtype):
    """Fallback (D does not pack into 128 lanes): plain row tile, full-D blocks."""
    x_nat = x_ref[...]
    h = jnp.dot(x_nat, w1_ref[...], preferred_element_type=jnp.float32)
    h = jnp.maximum(h + b1_ref[...].astype(jnp.float32), 0.0)
    y = jnp.dot(h.astype(mm_dtype), w2_ref[...], preferred_element_type=jnp.float32)
    y = y + b2_ref[...].astype(jnp.float32)
    r = x_nat.astype(jnp.float32) + y
    mean = jnp.mean(r, axis=-1, keepdims=True)
    cent = r - mean
    var = jnp.mean(cent * cent, axis=-1, keepdims=True)
    normed = cent * lax.rsqrt(var + LN_EPS)
    o_ref[...] = (normed * g_ref[...].astype(jnp.float32)
                  + be_ref[...].astype(jnp.float32)).astype(o_ref.dtype)


def _pick_tile(n_rows, desired, min_steps):
    """Rows per grid step: as close to `desired` as possible (8-row granule)
    while keeping >= `min_steps` grid steps when n_rows allows (v7x megacore:
    >= 2 pipelined steps per TensorCore so I/O DMA stays hidden)."""
    cap = max(8, (((n_rows + min_steps - 1) // min_steps) // 8) * 8)
    return max(8, (min(int(desired), cap) // 8) * 8)


def _const_spec():
    # Whole-array VMEM resident (tiny constants; no per-step double-buffered DMA).
    return pl.BlockSpec(memory_space=pltpu.MemorySpace.VMEM)


@functools.partial(jax.jit, static_argnames=("tm",))
def linres(x, w1, b1, w2, b2, gamma, beta, *, tm=None):
    """LayerNorm(x + Linear2(ReLU(Linear1(x)))), x: (B, S, D).

    Fast path: pass x and weights in bf16 (bf16-fed MXU, f32 accumulation and
    LayerNorm, bf16 store).  f32 inputs keep full f32 matmul numerics.
    `tm` = logical rows per grid step (default 4096; sweep 2048/4096/8192)."""
    B, S, D = x.shape
    H = w1.shape[1]
    N = B * S
    rows_per_step = 4096 if tm is None else int(tm)

    # Pack `pack` logical rows per 128-lane register row when D divides 128.
    pack = 128 // D if (D < 128 and 128 % D == 0) else 1

    if pack > 1:
        PD, PH = pack * D, pack * H
        np_rows = (N + pack - 1) // pack
        tile = _pick_tile(np_rows, max(8, rows_per_step // pack), min_steps=4)
        grid_len = pl.cdiv(np_rows, tile)
        np_pad = grid_len * tile
        n_pad = np_pad * pack

        x2 = x.reshape(N, D)
        if n_pad != N:
            x2 = jnp.pad(x2, ((0, n_pad - N), (0, 0)))   # zero rows: benign, dropped
        xp = x2.reshape(np_pad, PD)                       # lane-dense packed view (free)

        # Block-diagonal packed weights + lane-tiled vectors, built once outside.
        w1p = jnp.kron(jnp.eye(pack, dtype=w1.dtype), w1)          # (PD, PH)
        w2p = jnp.kron(jnp.eye(pack, dtype=w2.dtype), w2)          # (PH, PD)
        b1p = jnp.tile(b1, pack).reshape(1, PH)
        b2p = jnp.tile(b2, pack).reshape(1, PD)
        gp = jnp.tile(gamma, pack).reshape(1, PD)
        bep = jnp.tile(beta, pack).reshape(1, PD)

        kernel = functools.partial(_linres_packed_kernel, feat=D,
                                   packed_feat=PD, mm_dtype=w2.dtype)
        out = pl.pallas_call(
            kernel,
            out_shape=jax.ShapeDtypeStruct((np_pad, PD), x.dtype),
            grid_spec=pltpu.PrefetchScalarGridSpec(
                num_scalar_prefetch=0,
                grid=(grid_len,),
                in_specs=[
                    pl.BlockSpec((tile, PD), lambda i: (i, 0)),   # packed x rows
                    _const_spec(), _const_spec(), _const_spec(),  # W1p, b1p, W2p
                    _const_spec(), _const_spec(), _const_spec(),  # b2p, gamma, beta
                ],
                out_specs=pl.BlockSpec((tile, PD), lambda i: (i, 0)),
            ),
            compiler_params=pltpu.CompilerParams(
                dimension_semantics=("parallel",)),
        )(xp, w1p, b1p, w2p, b2p, gp, bep)
        return out.reshape(n_pad, D)[:N].reshape(B, S, D)

    # ---- generic fallback: D does not pack evenly into 128 lanes -------------
    tile = _pick_tile(N, rows_per_step, min_steps=4)
    grid_len = pl.cdiv(N, tile)
    n_pad = grid_len * tile
    x2 = x.reshape(N, D)
    if n_pad != N:
        x2 = jnp.pad(x2, ((0, n_pad - N), (0, 0)))

    kernel = functools.partial(_linres_rowtile_kernel, mm_dtype=w2.dtype)
    out = pl.pallas_call(
        kernel,
        out_shape=jax.ShapeDtypeStruct((n_pad, D), x.dtype),
        grid_spec=pltpu.PrefetchScalarGridSpec(
            num_scalar_prefetch=0,
            grid=(grid_len,),
            in_specs=[
                pl.BlockSpec((tile, D), lambda i: (i, 0)),
                _const_spec(), _const_spec(), _const_spec(),
                _const_spec(), _const_spec(), _const_spec(),
            ],
            out_specs=pl.BlockSpec((tile, D), lambda i: (i, 0)),
        ),
        compiler_params=pltpu.CompilerParams(
            dimension_semantics=("parallel",)),
    )(x2, w1, b1.reshape(1, H), w2, b2.reshape(1, D),
      gamma.reshape(1, D), beta.reshape(1, D))
    return out[:N].reshape(B, S, D)


def linres_ref(x, w1, b1, w2, b2, gamma, beta):
    """Pure-JAX reference of the PyTorch forward (eval mode)."""
    h = jnp.maximum(x @ w1 + b1, 0.0)
    y = h @ w2 + b2
    r = x + y
    mean = jnp.mean(r, axis=-1, keepdims=True)
    var = jnp.mean((r - mean) ** 2, axis=-1, keepdims=True)
    return (r - mean) / jnp.sqrt(var + LN_EPS) * gamma + beta


if __name__ == "__main__":
    key = jax.random.PRNGKey(0)

    def make_case(k, B, S, D, H):
        kx, kw1, kb1, kw2, kb2 = jax.random.split(k, 5)
        x = jax.random.normal(kx, (B, S, D), dtype=jnp.float32)
        w1 = jax.random.normal(kw1, (D, H), dtype=jnp.float32) * (1.0 / jnp.sqrt(D))
        b1 = jax.random.normal(kb1, (H,), dtype=jnp.float32) * 0.01
        w2 = jax.random.normal(kw2, (H, D), dtype=jnp.float32) * (1.0 / jnp.sqrt(H))
        b2 = jax.random.normal(kb2, (D,), dtype=jnp.float32) * 0.01
        gamma = jnp.ones((D,), dtype=jnp.float32)
        beta = jnp.zeros((D,), dtype=jnp.float32)
        return (x, w1, b1, w2, b2, gamma, beta)

    k1, k2, k3 = jax.random.split(key, 3)

    # Case 1: module-consistent small shapes (B=2, S=8, inp=32, hid=64)
    # -> lane-packed path (pack=4), full f32 numerics.
    args1 = make_case(k1, 2, 8, 32, 64)
    out1 = jax.block_until_ready(linres(*args1))
    ref1 = linres_ref(*args1)
    assert out1.shape == args1[0].shape
    assert jnp.allclose(out1, ref1, atol=5e-5, rtol=5e-5), "mismatch (f32 packed)"

    # Case 2: ragged row count (B=3, S=50 -> N=150) exercises packed tail padding.
    args2 = make_case(k2, 3, 50, 32, 64)
    out2 = jax.block_until_ready(linres(*args2))
    ref2 = linres_ref(*args2)
    assert out2.shape == args2[0].shape
    assert jnp.allclose(out2, ref2, atol=5e-5, rtol=5e-5), "mismatch (f32 ragged)"

    # Case 3: bf16 fast path (bf16-fed MXU, f32 accumulation + f32 LayerNorm).
    args3 = tuple(a.astype(jnp.bfloat16) for a in args1)
    out3 = jax.block_until_ready(linres(*args3))
    ref3 = linres_ref(*[a.astype(jnp.float32) for a in args3])
    assert out3.dtype == jnp.bfloat16
    assert jnp.allclose(out3.astype(jnp.float32), ref3, atol=0.1, rtol=0.1), \
        "mismatch (bf16 fast path)"

    # Case 4: D=48 (does not divide 128) exercises the generic fallback kernel.
    args4 = make_case(k3, 2, 20, 48, 96)
    out4 = jax.block_until_ready(linres(*args4))
    ref4 = linres_ref(*args4)
    assert jnp.allclose(out4, ref4, atol=5e-5, rtol=5e-5), "mismatch (fallback)"

    print("KERNEL_OK")
</pallas_src>

<mosaic_0001>
module attributes {stable_mosaic.version = 11 : i64} {
  func.func @_linres_packed_kernel(%arg0: i32, %arg1: memref<8x128xf32, #tpu.memory_space<vmem>>, %arg2: memref<128x256xf32, #tpu.memory_space<vmem>>, %arg3: memref<1x256xf32, #tpu.memory_space<vmem>>, %arg4: memref<256x128xf32, #tpu.memory_space<vmem>>, %arg5: memref<1x128xf32, #tpu.memory_space<vmem>>, %arg6: memref<1x128xf32, #tpu.memory_space<vmem>>, %arg7: memref<1x128xf32, #tpu.memory_space<vmem>>, %arg8: memref<8x128xf32, #tpu.memory_space<vmem>>) attributes {dimension_semantics = [#tpu.dimension_semantics<parallel>], iteration_bounds = array<i64: 1>, scalar_prefetch = 0 : i64, scratch_operands = 0 : i64, tpu.core_type = #tpu.core_type<tc>, window_params = [{transform_indices = @transform_0, window_bounds = array<i64: 8, 128>}, {pipeline_mode = #tpu.pipeline_mode<synchronous>, transform_indices = @transform_1, window_bounds = array<i64: 128, 256>}, {pipeline_mode = #tpu.pipeline_mode<synchronous>, transform_indices = @transform_2, window_bounds = array<i64: 1, 256>}, {pipeline_mode = #tpu.pipeline_mode<synchronous>, transform_indices = @transform_3, window_bounds = array<i64: 256, 128>}, {pipeline_mode = #tpu.pipeline_mode<synchronous>, transform_indices = @transform_4, window_bounds = array<i64: 1, 128>}, {pipeline_mode = #tpu.pipeline_mode<synchronous>, transform_indices = @transform_5, window_bounds = array<i64: 1, 128>}, {pipeline_mode = #tpu.pipeline_mode<synchronous>, transform_indices = @transform_6, window_bounds = array<i64: 1, 128>}, {transform_indices = @transform_7, window_bounds = array<i64: 8, 128>}]} {
    %c0 = arith.constant 0 : index
    %c0_0 = arith.constant 0 : index
    %0 = vector.load %arg1[%c0, %c0_0] : memref<8x128xf32, #tpu.memory_space<vmem>>, vector<8x128xf32>
    %c0_1 = arith.constant 0 : index
    %c0_2 = arith.constant 0 : index
    %1 = vector.load %arg2[%c0_1, %c0_2] : memref<128x256xf32, #tpu.memory_space<vmem>>, vector<128x256xf32>
    %cst = arith.constant dense<0.000000e+00> : vector<8x256xf32>
    %2 = tpu.matmul %0, %1, %cst {dimension_numbers = #tpu.dot_dimension_numbers<[1], [0], [0], [1], [0, 0, 1, 1], [], []>} : vector<8x128xf32>, vector<128x256xf32>, vector<8x256xf32> -> vector<8x256xf32>
    %c0_3 = arith.constant 0 : index
    %c0_4 = arith.constant 0 : index
    %3 = vector.load %arg3[%c0_3, %c0_4] : memref<1x256xf32, #tpu.memory_space<vmem>>, vector<1x256xf32>
    %4 = vector.broadcast %3 : vector<1x256xf32> to vector<8x256xf32>
    %5 = arith.addf %2, %4 : vector<8x256xf32>
    %cst_5 = arith.constant 0.000000e+00 : f32
    %6 = vector.broadcast %cst_5 : f32 to vector<8x256xf32>
    %7 = arith.maximumf %5, %6 : vector<8x256xf32>
    %c0_6 = arith.constant 0 : index
    %c0_7 = arith.constant 0 : index
    %8 = vector.load %arg4[%c0_6, %c0_7] : memref<256x128xf32, #tpu.memory_space<vmem>>, vector<256x128xf32>
    %cst_8 = arith.constant dense<0.000000e+00> : vector<8x128xf32>
    %9 = tpu.matmul %7, %8, %cst_8 {dimension_numbers = #tpu.dot_dimension_numbers<[1], [0], [0], [1], [0, 0, 1, 1], [], []>} : vector<8x256xf32>, vector<256x128xf32>, vector<8x128xf32> -> vector<8x128xf32>
    %c0_9 = arith.constant 0 : index
    %c0_10 = arith.constant 0 : index
    %10 = vector.load %arg5[%c0_9, %c0_10] : memref<1x128xf32, #tpu.memory_space<vmem>>, vector<1x128xf32>
    %11 = vector.broadcast %10 : vector<1x128xf32> to vector<8x128xf32>
    %12 = arith.addf %9, %11 : vector<8x128xf32>
    %13 = arith.addf %0, %12 : vector<8x128xf32>
    %14 = tpu.iota {dimensions = array<i32: 1>} : vector<8x128xi32>
    %c16_i32 = arith.constant 16 : i32
    %15 = tpu.dynamic_rotate %13 by %c16_i32 dim 1 : vector<8x128xf32>, i32 -> vector<8x128xf32>
    %c112_i32 = arith.constant 112 : i32
    %16 = tpu.dynamic_rotate %13 by %c112_i32 dim 1 : vector<8x128xf32>, i32 -> vector<8x128xf32>
    %c16_i32_11 = arith.constant 16 : i32
    %17 = vector.broadcast %c16_i32_11 : i32 to vector<8x128xi32>
    %18 = arith.andi %14, %17 : vector<8x128xi32>
    %c0_i32 = arith.constant 0 : i32
    %19 = vector.broadcast %c0_i32 : i32 to vector<8x128xi32>
    %20 = arith.cmpi ne, %18, %19 : vector<8x128xi32>
    %21 = arith.select %20, %15, %16 : vector<8x128xi1>, vector<8x128xf32>
    %22 = arith.addf %13, %21 : vector<8x128xf32>
    %c8_i32 = arith.constant 8 : i32
    %23 = tpu.dynamic_rotate %22 by %c8_i32 dim 1 : vector<8x128xf32>, i32 -> vector<8x128xf32>
    %c120_i32 = arith.constant 120 : i32
    %24 = tpu.dynamic_rotate %22 by %c120_i32 dim 1 : vector<8x128xf32>, i32 -> vector<8x128xf32>
    %c8_i32_12 = arith.constant 8 : i32
    %25 = vector.broadcast %c8_i32_12 : i32 to vector<8x128xi32>
    %26 = arith.andi %14, %25 : vector<8x128xi32>
    %c0_i32_13 = arith.constant 0 : i32
    %27 = vector.broadcast %c0_i32_13 : i32 to vector<8x128xi32>
    %28 = arith.cmpi ne, %26, %27 : vector<8x128xi32>
    %29 = arith.select %28, %23, %24 : vector<8x128xi1>, vector<8x128xf32>
    %30 = arith.addf %22, %29 : vector<8x128xf32>
    %c4_i32 = arith.constant 4 : i32
    %31 = tpu.dynamic_rotate %30 by %c4_i32 dim 1 : vector<8x128xf32>, i32 -> vector<8x128xf32>
    %c124_i32 = arith.constant 124 : i32
    %32 = tpu.dynamic_rotate %30 by %c124_i32 dim 1 : vector<8x128xf32>, i32 -> vector<8x128xf32>
    %c4_i32_14 = arith.constant 4 : i32
    %33 = vector.broadcast %c4_i32_14 : i32 to vector<8x128xi32>
    %34 = arith.andi %14, %33 : vector<8x128xi32>
    %c0_i32_15 = arith.constant 0 : i32
    %35 = vector.broadcast %c0_i32_15 : i32 to vector<8x128xi32>
    %36 = arith.cmpi ne, %34, %35 : vector<8x128xi32>
    %37 = arith.select %36, %31, %32 : vector<8x128xi1>, vector<8x128xf32>
    %38 = arith.addf %30, %37 : vector<8x128xf32>
    %c2_i32 = arith.constant 2 : i32
    %39 = tpu.dynamic_rotate %38 by %c2_i32 dim 1 : vector<8x128xf32>, i32 -> vector<8x128xf32>
    %c126_i32 = arith.constant 126 : i32
    %40 = tpu.dynamic_rotate %38 by %c126_i32 dim 1 : vector<8x128xf32>, i32 -> vector<8x128xf32>
    %c2_i32_16 = arith.constant 2 : i32
    %41 = vector.broadcast %c2_i32_16 : i32 to vector<8x128xi32>
    %42 = arith.andi %14, %41 : vector<8x128xi32>
    %c0_i32_17 = arith.constant 0 : i32
    %43 = vector.broadcast %c0_i32_17 : i32 to vector<8x128xi32>
    %44 = arith.cmpi ne, %42, %43 : vector<8x128xi32>
    %45 = arith.select %44, %39, %40 : vector<8x128xi1>, vector<8x128xf32>
    %46 = arith.addf %38, %45 : vector<8x128xf32>
    %c1_i32 = arith.constant 1 : i32
    %47 = tpu.dynamic_rotate %46 by %c1_i32 dim 1 : vector<8x128xf32>, i32 -> vector<8x128xf32>
    %c127_i32 = arith.constant 127 : i32
    %48 = tpu.dynamic_rotate %46 by %c127_i32 dim 1 : vector<8x128xf32>, i32 -> vector<8x128xf32>
    %c1_i32_18 = arith.constant 1 : i32
    %49 = vector.broadcast %c1_i32_18 : i32 to vector<8x128xi32>
    %50 = arith.andi %14, %49 : vector<8x128xi32>
    %c0_i32_19 = arith.constant 0 : i32
    %51 = vector.broadcast %c0_i32_19 : i32 to vector<8x128xi32>
    %52 = arith.cmpi ne, %50, %51 : vector<8x128xi32>
    %53 = arith.select %52, %47, %48 : vector<8x128xi1>, vector<8x128xf32>
    %54 = arith.addf %46, %53 : vector<8x128xf32>
    %cst_20 = arith.constant 3.125000e-02 : f32
    %55 = vector.broadcast %cst_20 : f32 to vector<8x128xf32>
    %56 = arith.mulf %54, %55 : vector<8x128xf32>
    %57 = arith.subf %13, %56 : vector<8x128xf32>
    %58 = arith.mulf %57, %57 : vector<8x128xf32>
    %c16_i32_21 = arith.constant 16 : i32
    %59 = tpu.dynamic_rotate %58 by %c16_i32_21 dim 1 : vector<8x128xf32>, i32 -> vector<8x128xf32>
    %c112_i32_22 = arith.constant 112 : i32
    %60 = tpu.dynamic_rotate %58 by %c112_i32_22 dim 1 : vector<8x128xf32>, i32 -> vector<8x128xf32>
    %c16_i32_23 = arith.constant 16 : i32
    %61 = vector.broadcast %c16_i32_23 : i32 to vector<8x128xi32>
    %62 = arith.andi %14, %61 : vector<8x128xi32>
    %c0_i32_24 = arith.constant 0 : i32
    %63 = vector.broadcast %c0_i32_24 : i32 to vector<8x128xi32>
    %64 = arith.cmpi ne, %62, %63 : vector<8x128xi32>
    %65 = arith.select %64, %59, %60 : vector<8x128xi1>, vector<8x128xf32>
    %66 = arith.addf %58, %65 : vector<8x128xf32>
    %c8_i32_25 = arith.constant 8 : i32
    %67 = tpu.dynamic_rotate %66 by %c8_i32_25 dim 1 : vector<8x128xf32>, i32 -> vector<8x128xf32>
    %c120_i32_26 = arith.constant 120 : i32
    %68 = tpu.dynamic_rotate %66 by %c120_i32_26 dim 1 : vector<8x128xf32>, i32 -> vector<8x128xf32>
    %c8_i32_27 = arith.constant 8 : i32
    %69 = vector.broadcast %c8_i32_27 : i32 to vector<8x128xi32>
    %70 = arith.andi %14, %69 : vector<8x128xi32>
    %c0_i32_28 = arith.constant 0 : i32
    %71 = vector.broadcast %c0_i32_28 : i32 to vector<8x128xi32>
    %72 = arith.cmpi ne, %70, %71 : vector<8x128xi32>
    %73 = arith.select %72, %67, %68 : vector<8x128xi1>, vector<8x128xf32>
    %74 = arith.addf %66, %73 : vector<8x128xf32>
    %c4_i32_29 = arith.constant 4 : i32
    %75 = tpu.dynamic_rotate %74 by %c4_i32_29 dim 1 : vector<8x128xf32>, i32 -> vector<8x128xf32>
    %c124_i32_30 = arith.constant 124 : i32
    %76 = tpu.dynamic_rotate %74 by %c124_i32_30 dim 1 : vector<8x128xf32>, i32 -> vector<8x128xf32>
    %c4_i32_31 = arith.constant 4 : i32
    %77 = vector.broadcast %c4_i32_31 : i32 to vector<8x128xi32>
    %78 = arith.andi %14, %77 : vector<8x128xi32>
    %c0_i32_32 = arith.constant 0 : i32
    %79 = vector.broadcast %c0_i32_32 : i32 to vector<8x128xi32>
    %80 = arith.cmpi ne, %78, %79 : vector<8x128xi32>
    %81 = arith.select %80, %75, %76 : vector<8x128xi1>, vector<8x128xf32>
    %82 = arith.addf %74, %81 : vector<8x128xf32>
    %c2_i32_33 = arith.constant 2 : i32
    %83 = tpu.dynamic_rotate %82 by %c2_i32_33 dim 1 : vector<8x128xf32>, i32 -> vector<8x128xf32>
    %c126_i32_34 = arith.constant 126 : i32
    %84 = tpu.dynamic_rotate %82 by %c126_i32_34 dim 1 : vector<8x128xf32>, i32 -> vector<8x128xf32>
    %c2_i32_35 = arith.constant 2 : i32
    %85 = vector.broadcast %c2_i32_35 : i32 to vector<8x128xi32>
    %86 = arith.andi %14, %85 : vector<8x128xi32>
    %c0_i32_36 = arith.constant 0 : i32
    %87 = vector.broadcast %c0_i32_36 : i32 to vector<8x128xi32>
    %88 = arith.cmpi ne, %86, %87 : vector<8x128xi32>
    %89 = arith.select %88, %83, %84 : vector<8x128xi1>, vector<8x128xf32>
    %90 = arith.addf %82, %89 : vector<8x128xf32>
    %c1_i32_37 = arith.constant 1 : i32
    %91 = tpu.dynamic_rotate %90 by %c1_i32_37 dim 1 : vector<8x128xf32>, i32 -> vector<8x128xf32>
    %c127_i32_38 = arith.constant 127 : i32
    %92 = tpu.dynamic_rotate %90 by %c127_i32_38 dim 1 : vector<8x128xf32>, i32 -> vector<8x128xf32>
    %c1_i32_39 = arith.constant 1 : i32
    %93 = vector.broadcast %c1_i32_39 : i32 to vector<8x128xi32>
    %94 = arith.andi %14, %93 : vector<8x128xi32>
    %c0_i32_40 = arith.constant 0 : i32
    %95 = vector.broadcast %c0_i32_40 : i32 to vector<8x128xi32>
    %96 = arith.cmpi ne, %94, %95 : vector<8x128xi32>
    %97 = arith.select %96, %91, %92 : vector<8x128xi1>, vector<8x128xf32>
    %98 = arith.addf %90, %97 : vector<8x128xf32>
    %cst_41 = arith.constant 3.125000e-02 : f32
    %99 = vector.broadcast %cst_41 : f32 to vector<8x128xf32>
    %100 = arith.mulf %98, %99 : vector<8x128xf32>
    %cst_42 = arith.constant 9.99999974E-6 : f32
    %101 = vector.broadcast %cst_42 : f32 to vector<8x128xf32>
    %102 = arith.addf %100, %101 : vector<8x128xf32>
    %103 = math.rsqrt %102 : vector<8x128xf32>
    %104 = arith.mulf %57, %103 : vector<8x128xf32>
    %c0_43 = arith.constant 0 : index
    %c0_44 = arith.constant 0 : index
    %105 = vector.load %arg6[%c0_43, %c0_44] : memref<1x128xf32, #tpu.memory_space<vmem>>, vector<1x128xf32>
    %106 = vector.broadcast %105 : vector<1x128xf32> to vector<8x128xf32>
    %107 = arith.mulf %104, %106 : vector<8x128xf32>
    %c0_45 = arith.constant 0 : index
    %c0_46 = arith.constant 0 : index
    %108 = vector.load %arg7[%c0_45, %c0_46] : memref<1x128xf32, #tpu.memory_space<vmem>>, vector<1x128xf32>
    %109 = vector.broadcast %108 : vector<1x128xf32> to vector<8x128xf32>
    %110 = arith.addf %107, %109 : vector<8x128xf32>
    %c0_47 = arith.constant 0 : index
    %c0_48 = arith.constant 0 : index
    %111 = vector.load %arg8[%c0_47, %c0_48] : memref<8x128xf32, #tpu.memory_space<vmem>>, vector<8x128xf32>
    tpu.vector_store %arg8[%c0_47, %c0_48], %110 {strides = array<i32>} : memref<8x128xf32, #tpu.memory_space<vmem>>, vector<8x128xf32>,
    return
  }
  func.func @transform_0(%arg0: i32) -> (i32, i32) {
    %c0_i32 = arith.constant 0 : i32
    %c0_i32_0 = arith.constant 0 : i32
    return %arg0, %c0_i32 : i32, i32
  }
  func.func @transform_1(%arg0: i32) -> (i32, i32) {
    %c0_i32 = arith.constant 0 : i32
    %c0_i32_0 = arith.constant 0 : i32
    %c0_i32_1 = arith.constant 0 : i32
    return %c0_i32, %c0_i32_0 : i32, i32
  }
  func.func @transform_2(%arg0: i32) -> (i32, i32) {
    %c0_i32 = arith.constant 0 : i32
    %c0_i32_0 = arith.constant 0 : i32
    %c0_i32_1 = arith.constant 0 : i32
    return %c0_i32, %c0_i32_0 : i32, i32
  }
  func.func @transform_3(%arg0: i32) -> (i32, i32) {
    %c0_i32 = arith.constant 0 : i32
    %c0_i32_0 = arith.constant 0 : i32
    %c0_i32_1 = arith.constant 0 : i32
    return %c0_i32, %c0_i32_0 : i32, i32
  }
  func.func @transform_4(%arg0: i32) -> (i32, i32) {
    %c0_i32 = arith.constant 0 : i32
    %c0_i32_0 = arith.constant 0 : i32
    %c0_i32_1 = arith.constant 0 : i32
    return %c0_i32, %c0_i32_0 : i32, i32
  }
  func.func @transform_5(%arg0: i32) -> (i32, i32) {
    %c0_i32 = arith.constant 0 : i32
    %c0_i32_0 = arith.constant 0 : i32
    %c0_i32_1 = arith.constant 0 : i32
    return %c0_i32, %c0_i32_0 : i32, i32
  }
  func.func @transform_6(%arg0: i32) -> (i32, i32) {
    %c0_i32 = arith.constant 0 : i32
    %c0_i32_0 = arith.constant 0 : i32
    %c0_i32_1 = arith.constant 0 : i32
    return %c0_i32, %c0_i32_0 : i32, i32
  }
  func.func @transform_7(%arg0: i32) -> (i32, i32) {
    %c0_i32 = arith.constant 0 : i32
    %c0_i32_0 = arith.constant 0 : i32
    return %arg0, %c0_i32 : i32, i32
  }
}

</mosaic_0001>

<llo_original>
// kernel: tile.23
$region0: #{tile.23}
  #allocation0 [shape = 's32[1]{0}', space=sflag, size = 0x4, scoped, tag = 'scoped memory for tile.23']
  %s0 = inlined_call_operand.vmem [shape: f32[64], index: 0, kind: input, shape index: {}]
  %s1 = inlined_call_operand.vmem [shape: f32[4,64], index: 1, kind: output, shape index: {}]
  // Predicated region
  $region2: #{tile.23} parent=0 // pred_check
    _
  $region3: #{tile.23} parent=0 // pred_check_branch
    %3 = sbr.rel (0) target = $region5
  $region4: #{tile.23} parent=0 // pred_region
    _
  $region5: #{tile.23} parent=0 // pred_fallthru
    _
  %v4 = vld [vmem:[%s0] ss:$0 sm:$0xff]
  %5 = vst [vmem:[%s1] sm:$0xf] %v4

// kernel: tile.24
$region0: #{tile.24}
  %s0 = inlined_call_operand.vmem [shape: f32[4,64], index: 0, kind: input, shape index: {}]
  %s1 = inlined_call_operand.vmem [shape: f32[1,256], index: 1, kind: output, shape index: {}]
  $region1: #{tile.24} parent=0
    #allocation0 [shape = 'u8[8192]{0}', space=vmem, size = 0x2000, scoped, tag = 'scoped mem for output reshape']
    #allocation1 [shape = 'u8[4096]{0}', space=vmem, size = 0x1000, scoped, tag = 'scoped mem for input reshape']
    %s3 = sshll.u32 1, 4
    %s4 = ssub.s32 %s3, 1
    %v5 = vld [vmem:[%s0] sm:%s4]
    %6 = vst [vmem:[#allocation1] sm:%s4] %v5
    %s7 = smov 3
    %v8 = vld [vmem:[#allocation1] ss:$2 sm:%s7]
    %vm9 = vcmask 523264
    %10 = vst.msk [vmem:[#allocation0] ss:$8 sm:$0x3] %vm9, %v8
    %s11 = scalar_lea.vmem [#allocation1], 1
    %s12 = smov 3
    %v13 = vld [vmem:[%s11] ss:$2 sm:%s12]
    %14 = vrot.lane.b32.xlu0 %v13, 64
    %v15 = vpop.permute.xlu0 %14
    %vm16 = vcmask 1048064
    %17 = vst.msk [vmem:[#allocation0] ss:$8 sm:$0x3] %vm16, %v15
    %s19 = sshll.u32 1, 1
    %s20 = ssub.s32 %s19, 1
    %v22 = vld [vmem:[#allocation0] sm:%s20]
    %s23 = sshll.u32 1, 1
    %s24 = ssub.s32 %s23, 1
    %25 = vst [vmem:[%s1] sm:%s24] %v22
    %s26 = scalar_lea.vmem [#allocation0], 8
    %v27 = vld [vmem:[%s26] sm:%s20]
    %s28 = sshll.u32 1, 1
    %s29 = ssub.s32 %s28, 1
    %s30 = scalar_lea.vmem %s1, 1
    %31 = vst [vmem:[%s30] sm:%s29] %v27

// kernel: tile.28
$region0: #{tile.28}
  #allocation0 [shape = 's32[1]{0}', space=sflag, size = 0x4, scoped, tag = 'scoped memory for tile.28']
  %s0 = inlined_call_operand.vmem [shape: f32[32], index: 0, kind: input, shape index: {}]
  %s1 = inlined_call_operand.vmem [shape: f32[4,32], index: 1, kind: output, shape index: {}]
  // Predicated region
  $region2: #{tile.28} parent=0 // pred_check
    _
  $region3: #{tile.28} parent=0 // pred_check_branch
    %3 = sbr.rel (0) target = $region5
  $region4: #{tile.28} parent=0 // pred_region
    _
  $region5: #{tile.28} parent=0 // pred_fallthru
    _
  %v4 = vld [vmem:[%s0] ss:$0 sm:$0xff]
  %5 = vst [vmem:[%s1] sm:$0xf] %v4

// kernel: tile.29
$region0: #{tile.29}
  %s0 = inlined_call_operand.vmem [shape: f32[4,32], index: 0, kind: input, shape index: {}]
  %s1 = inlined_call_operand.vmem [shape: f32[1,128], index: 1, kind: output, shape index: {}]
  $region1: #{tile.29} parent=0
    #allocation0 [shape = 'u8[4096]{0}', space=vmem, size = 0x1000, scoped, tag = 'scoped mem for output reshape']
    #allocation1 [shape = 'u8[4096]{0}', space=vmem, size = 0x1000, scoped, tag = 'scoped mem for input reshape']
    %s3 = sshll.u32 1, 4
    %s4 = ssub.s32 %s3, 1
    %v5 = vld [vmem:[%s0] sm:%s4]
    %6 = vst [vmem:[#allocation1] sm:%s4] %v5
    %v7 = vld [vmem:[#allocation1] sm:$0x1]
    %vm8 = vcmask 261120
    %9 = vst.msk [vmem:[#allocation0] sm:$0x1] %vm8, %v7
    %s10 = scalar_lea.vmem [#allocation1], 3
    %v11 = vld [vmem:[%s10] sm:$0x1]
    %12 = vrot.lane.b32.xlu0 %v11, 96
    %v13 = vpop.permute.xlu0 %12
    %vm14 = vcmask 1048320
    %15 = vst.msk [vmem:[#allocation0] sm:$0x1] %vm14, %v13
    %s16 = scalar_lea.vmem [#allocation1], 2
    %v17 = vld [vmem:[%s16] sm:$0x1]
    %18 = vrot.lane.b32.xlu0 %v17, 64
    %v19 = vpop.permute.xlu0 %18
    %vm20 = vcmask 785920
    %21 = vst.msk [vmem:[#allocation0] sm:$0x1] %vm20, %v19
    %s22 = scalar_lea.vmem [#allocation1], 1
    %v23 = vld [vmem:[%s22] sm:$0x1]
    %24 = vrot.lane.b32.xlu0 %v23, 32
    %v25 = vpop.permute.xlu0 %24
    %vm26 = vcmask 523520
    %27 = vst.msk [vmem:[#allocation0] sm:$0x1] %vm26, %v25
    %s29 = sshll.u32 1, 1
    %s30 = ssub.s32 %s29, 1
    %v32 = vld [vmem:[#allocation0] sm:%s30]
    %s33 = sshll.u32 1, 1
    %s34 = ssub.s32 %s33, 1
    %35 = vst [vmem:[%s1] sm:%s34] %v32

// kernel: linres.1
$region0: #{linres.1}
  #allocation0 [shape = 'u32[]', space=smem, size = 0x4, offset = 0x4, fixed_abs, tag = 'smem constant byte address 0x4 - core index']
  #allocation1 [shape = 'u32[144,128]{1,0:T(1,128)}', space=vmem, size = 0x12000, scoped, tag = 'internal scratch']
  %s0 = inlined_call_operand.vmem [shape: f32[8,128], index: 0, kind: input, shape index: {}]
  %s1 = inlined_call_operand.vmem [shape: f32[128,256], index: 1, kind: input, shape index: {}]
  %s2 = inlined_call_operand.vmem [shape: f32[1,256], index: 2, kind: input, shape index: {}]
  %s3 = inlined_call_operand.vmem [shape: f32[256,128], index: 3, kind: input, shape index: {}]
  %s4 = inlined_call_operand.vmem [shape: f32[1,128], index: 4, kind: input, shape index: {}]
  %s5 = inlined_call_operand.vmem [shape: f32[1,128], index: 5, kind: input, shape index: {}]
  %s6 = inlined_call_operand.vmem [shape: f32[1,128], index: 6, kind: input, shape index: {}]
  %s7 = inlined_call_operand.vmem [shape: f32[8,128], index: 7, kind: output, shape index: {}]
  %s8 = sld [smem:[#allocation0]]
  $region38: #{linres.1} parent=0
    _
  %s10 = ssub.s32 1, %s8
  %s11 = scalar_select 0, %s10, %s8
  // Predicated region
  $region2: #{linres.1} parent=0 // pred_check
    _
  $region3: #{linres.1} parent=0 // pred_check_branch
    %13 = sbr.rel (0) target = $region5
  $region4: #{linres.1} parent=0 // pred_region
    _
  $region5: #{linres.1} parent=0 // pred_fallthru
    _
  // Predicated region
  $region6: #{linres.1} parent=0 // pred_check
    _
  $region7: #{linres.1} parent=0 // pred_check_branch
    %15 = sbr.rel (0) target = $region9
  $region8: #{linres.1} parent=0 // pred_region
    _
  $region9: #{linres.1} parent=0 // pred_fallthru
    _
  // Predicated region
  $region10: #{linres.1} parent=0 // pred_check
    _
  $region11: #{linres.1} parent=0 // pred_check_branch
    %17 = sbr.rel (0) target = $region13
  $region12: #{linres.1} parent=0 // pred_region
    _
  $region13: #{linres.1} parent=0 // pred_fallthru
    _
  // Predicated region
  $region14: #{linres.1} parent=0 // pred_check
    _
  $region15: #{linres.1} parent=0 // pred_check_branch
    %19 = sbr.rel (0) target = $region17
  $region16: #{linres.1} parent=0 // pred_region
    _
  $region17: #{linres.1} parent=0 // pred_fallthru
    _
  // Predicated region
  $region18: #{linres.1} parent=0 // pred_check
    _
  $region19: #{linres.1} parent=0 // pred_check_branch
    %21 = sbr.rel (0) target = $region21
  $region20: #{linres.1} parent=0 // pred_region
    _
  $region21: #{linres.1} parent=0 // pred_fallthru
    _
  // Predicated region
  $region22: #{linres.1} parent=0 // pred_check
    _
  $region23: #{linres.1} parent=0 // pred_check_branch
    %23 = sbr.rel (0) target = $region25
  $region24: #{linres.1} parent=0 // pred_region
    _
  $region25: #{linres.1} parent=0 // pred_fallthru
    _
  // Predicated region
  $region26: #{linres.1} parent=0 // pred_check
    _
  $region27: #{linres.1} parent=0 // pred_check_branch
    %25 = sbr.rel (0) target = $region29
  $region28: #{linres.1} parent=0 // pred_region
    _
  $region29: #{linres.1} parent=0 // pred_fallthru
    _
  %v26 = vld [vmem:[%s0] sm:$0xff]
  %v27 = vld [vmem:[%s1] sm:$0xff]
  %v28 = vld [vmem:[%s1 + $0x8] sm:$0xff]
  %v29 = vld [vmem:[%s1 + $0x10] sm:$0xff]
  %v30 = vld [vmem:[%s1 + $0x18] sm:$0xff]
  %v31 = vld [vmem:[%s1 + $0x20] sm:$0xff]
  %v32 = vld [vmem:[%s1 + $0x28] sm:$0xff]
  %v33 = vld [vmem:[%s1 + $0x30] sm:$0xff]
  %v34 = vld [vmem:[%s1 + $0x38] sm:$0xff]
  %v35 = vld [vmem:[%s1 + $0x40] sm:$0xff]
  %v36 = vld [vmem:[%s1 + $0x48] sm:$0xff]
  %v37 = vld [vmem:[%s1 + $0x50] sm:$0xff]
  %v38 = vld [vmem:[%s1 + $0x58] sm:$0xff]
  %v39 = vld [vmem:[%s1 + $0x60] sm:$0xff]
  %v40 = vld [vmem:[%s1 + $0x68] sm:$0xff]
  %v41 = vld [vmem:[%s1 + $0x70] sm:$0xff]
  %v42 = vld [vmem:[%s1 + $0x78] sm:$0xff]
  %v43 = vld [vmem:[%s1 + $0x80] sm:$0xff]
  %v44 = vld [vmem:[%s1 + $0x88] sm:$0xff]
  %v45 = vld [vmem:[%s1 + $0x90] sm:$0xff]
  %v46 = vld [vmem:[%s1 + $0x98] sm:$0xff]
  %v47 = vld [vmem:[%s1 + $0xa0] sm:$0xff]
  %v48 = vld [vmem:[%s1 + $0xa8] sm:$0xff]
  %v49 = vld [vmem:[%s1 + $0xb0] sm:$0xff]
  %v50 = vld [vmem:[%s1 + $0xb8] sm:$0xff]
  %v51 = vld [vmem:[%s1 + $0xc0] sm:$0xff]
  %v52 = vld [vmem:[%s1 + $0xc8] sm:$0xff]
  %v53 = vld [vmem:[%s1 + $0xd0] sm:$0xff]
  %v54 = vld [vmem:[%s1 + $0xd8] sm:$0xff]
  %v55 = vld [vmem:[%s1 + $0xe0] sm:$0xff]
  %v56 = vld [vmem:[%s1 + $0xe8] sm:$0xff]
  %v57 = vld [vmem:[%s1 + $0xf0] sm:$0xff]
  %v58 = vld [vmem:[%s1 + $0xf8] sm:$0xff]
  %v59 = vld [vmem:[%s2] sm:$0x3]
  %v61 = vlaneseq
  %v62 = vshrl.u32 %v61, 7
  %v63 = vsub.s32 0, %v62
  %v64 = vrot.slane %v59, %v63
  %v65 = vlaneseq
  %v66 = vshrl.u32 %v65, 7
  %v67 = vsub.s32 1, %v66
  %v68 = vrot.slane %v59, %v67
  %71 = vmatprep.subr.mxu0 %v58
  %72 = vmatpush1.msra.mxu0 %v57
  %73 = vmatprep.subr.mxu0 %v56
  %74 = vmatpush1.msra.mxu0 %v55
  %75 = vmatprep.subr.mxu0 %v54
  %76 = vmatpush1.msra.mxu0 %v53
  %77 = vmatprep.subr.mxu0 %v52
  %78 = vmatpush1.msra.mxu0 %v51
  %79 = vmatprep.subr.mxu0 %v50
  %80 = vmatpush1.msra.mxu0 %v49
  %81 = vmatprep.subr.mxu0 %v48
  %82 = vmatpush1.msra.mxu0 %v47
  %83 = vmatprep.subr.mxu0 %v46
  %84 = vmatpush1.msra.mxu0 %v45
  %85 = vmatprep.subr.mxu0 %v44
  %86 = vmatpush1.msra.mxu0 %v43
  %87 = vmatprep.subr.mxu0 %v42
  %88 = vmatpush1.msra.mxu0 %v41
  %89 = vmatprep.subr.mxu0 %v40
  %90 = vmatpush1.msra.mxu0 %v39
  %91 = vmatprep.subr.mxu0 %v38
  %92 = vmatpush1.msra.mxu0 %v37
  %93 = vmatprep.subr.mxu0 %v36
  %94 = vmatpush1.msra.mxu0 %v35
  %95 = vmatprep.subr.mxu0 %v34
  %96 = vmatpush1.msra.mxu0 %v33
  %97 = vmatprep.subr.mxu0 %v32
  %98 = vmatpush1.msra.mxu0 %v31
  %99 = vmatprep.subr.mxu0 %v30
  %100 = vmatpush1.msra.mxu0 %v29
  %101 = vmatprep.subr.mxu0 %v28
  %102 = vmatpush1.msra.mxu0 %v27
  %103 = vmatprep.subr.mxu0 0.0
  %104 = vmatpush2.msra.mxu0 0.0
  %105 = vmatprep.subr.mxu0 0.0
  %106 = vmatpush2.msra.mxu0 0.0
  %107 = vmatprep.subr.mxu0 0.0
  %108 = vmatpush2.msra.mxu0 0.0
  %109 = vmatprep.subr.mxu0 0.0
  %110 = vmatpush2.msra.mxu0 0.0
  %111 = vmatprep.subr.mxu0 0.0
  %112 = vmatpush2.msra.mxu0 0.0
  %113 = vmatprep.subr.mxu0 0.0
  %114 = vmatpush2.msra.mxu0 0.0
  %115 = vmatprep.subr.mxu0 0.0
  %116 = vmatpush2.msra.mxu0 0.0
  %117 = vmatprep.subr.mxu0 0.0
  %118 = vmatpush2.msra.mxu0 0.0
  %119 = vmatprep.subr.mxu0 0.0
  %120 = vmatpush2.msra.mxu0 0.0
  %121 = vmatprep.subr.mxu0 0.0
  %122 = vmatpush2.msra.mxu0 0.0
  %123 = vmatprep.subr.mxu0 0.0
  %124 = vmatpush2.msra.mxu0 0.0
  %125 = vmatprep.subr.mxu0 0.0
  %126 = vmatpush2.msra.mxu0 0.0
  %127 = vmatprep.subr.mxu0 0.0
  %128 = vmatpush2.msra.mxu0 0.0
  %129 = vmatprep.subr.mxu0 0.0
  %130 = vmatpush2.msra.mxu0 0.0
  %131 = vmatprep.subr.mxu0 0.0
  %132 = vmatpush2.msra.mxu0 0.0
  %133 = vmatprep.subr.mxu0 0.0
  %134 = vmatpush2.msra.mxu0 0.0
  %135 = vmatprep.mubr.f32.mxu0 0.0
  %136 = vmatmul.mubr.f32.gmra.mxu0 %v26
  %v137 = vpop.f32.mrf.mxu0
  %v138 = vadd.f32 %v64, %v137
  %v139 = vpop.f32.mrf.mxu0
  %v140 = vadd.f32 %v68, %v139
  %141 = vdwg.mxu0
  %v142 = vmax.f32 %v138, 0.0
  %v143 = vmax.f32 %v140, 0.0
  %v144 = vld [vmem:[%s3] sm:$0xff]
  %v145 = vld [vmem:[%s3 + $0x8] sm:$0xff]
  %v146 = vld [vmem:[%s3 + $0x10] sm:$0xff]
  %v147 = vld [vmem:[%s3 + $0x18] sm:$0xff]
  %v148 = vld [vmem:[%s3 + $0x20] sm:$0xff]
  %v149 = vld [vmem:[%s3 + $0x28] sm:$0xff]
  %v150 = vld [vmem:[%s3 + $0x30] sm:$0xff]
  %v151 = vld [vmem:[%s3 + $0x38] sm:$0xff]
  %v152 = vld [vmem:[%s3 + $0x40] sm:$0xff]
  %v153 = vld [vmem:[%s3 + $0x48] sm:$0xff]
  %v154 = vld [vmem:[%s3 + $0x50] sm:$0xff]
  %v155 = vld [vmem:[%s3 + $0x58] sm:$0xff]
  %v156 = vld [vmem:[%s3 + $0x60] sm:$0xff]
  %v157 = vld [vmem:[%s3 + $0x68] sm:$0xff]
  %v158 = vld [vmem:[%s3 + $0x70] sm:$0xff]
  %v159 = vld [vmem:[%s3 + $0x78] sm:$0xff]
  %v160 = vld [vmem:[%s3 + $0x80] sm:$0xff]
  %v161 = vld [vmem:[%s3 + $0x88] sm:$0xff]
  %v162 = vld [vmem:[%s3 + $0x90] sm:$0xff]
  %v163 = vld [vmem:[%s3 + $0x98] sm:$0xff]
  %v164 = vld [vmem:[%s3 + $0xa0] sm:$0xff]
  %v165 = vld [vmem:[%s3 + $0xa8] sm:$0xff]
  %v166 = vld [vmem:[%s3 + $0xb0] sm:$0xff]
  %v167 = vld [vmem:[%s3 + $0xb8] sm:$0xff]
  %v168 = vld [vmem:[%s3 + $0xc0] sm:$0xff]
  %v169 = vld [vmem:[%s3 + $0xc8] sm:$0xff]
  %v170 = vld [vmem:[%s3 + $0xd0] sm:$0xff]
  %v171 = vld [vmem:[%s3 + $0xd8] sm:$0xff]
  %v172 = vld [vmem:[%s3 + $0xe0] sm:$0xff]
  %v173 = vld [vmem:[%s3 + $0xe8] sm:$0xff]
  %v174 = vld [vmem:[%s3 + $0xf0] sm:$0xff]
  %v175 = vld [vmem:[%s3 + $0xf8] sm:$0xff]
  %v176 = vld [vmem:[%s4] sm:$0x1]
  %v178 = vlaneseq
  %v179 = vshrl.u32 %v178, 7
  %v180 = vsub.s32 0, %v179
  %v181 = vrot.slane %v176, %v180
  %183 = vmatprep.subr.mxu0 0.0
  %184 = vmatpush1.msra.mxu0 %v159
  %185 = vmatprep.subr.mxu0 0.0
  %186 = vmatpush1.msra.mxu0 %v158
  %187 = vmatprep.subr.mxu0 0.0
  %188 = vmatpush1.msra.mxu0 %v157
  %189 = vmatprep.subr.mxu0 0.0
  %190 = vmatpush1.msra.mxu0 %v156
  %191 = vmatprep.subr.mxu0 0.0
  %192 = vmatpush1.msra.mxu0 %v155
  %193 = vmatprep.subr.mxu0 0.0
  %194 = vmatpush1.msra.mxu0 %v154
  %195 = vmatprep.subr.mxu0 0.0
  %196 = vmatpush1.msra.mxu0 %v153
  %197 = vmatprep.subr.mxu0 0.0
  %198 = vmatpush1.msra.mxu0 %v152
  %199 = vmatprep.subr.mxu0 0.0
  %200 = vmatpush1.msra.mxu0 %v151
  %201 = vmatprep.subr.mxu0 0.0
  %202 = vmatpush1.msra.mxu0 %v150
  %203 = vmatprep.subr.mxu0 0.0
  %204 = vmatpush1.msra.mxu0 %v149
  %205 = vmatprep.subr.mxu0 0.0
  %206 = vmatpush1.msra.mxu0 %v148
  %207 = vmatprep.subr.mxu0 0.0
  %208 = vmatpush1.msra.mxu0 %v147
  %209 = vmatprep.subr.mxu0 0.0
  %210 = vmatpush1.msra.mxu0 %v146
  %211 = vmatprep.subr.mxu0 0.0
  %212 = vmatpush1.msra.mxu0 %v145
  %213 = vmatprep.subr.mxu0 0.0
  %214 = vmatpush1.msra.mxu0 %v144
  %215 = vmatprep.subr.mxu0 0.0
  %216 = vmatpush2.msra.mxu0 %v175
  %217 = vmatprep.subr.mxu0 0.0
  %218 = vmatpush2.msra.mxu0 %v174
  %219 = vmatprep.subr.mxu0 0.0
  %220 = vmatpush2.msra.mxu0 %v173
  %221 = vmatprep.subr.mxu0 0.0
  %222 = vmatpush2.msra.mxu0 %v172
  %223 = vmatprep.subr.mxu0 0.0
  %224 = vmatpush2.msra.mxu0 %v171
  %225 = vmatprep.subr.mxu0 0.0
  %226 = vmatpush2.msra.mxu0 %v170
  %227 = vmatprep.subr.mxu0 0.0
  %228 = vmatpush2.msra.mxu0 %v169
  %229 = vmatprep.subr.mxu0 0.0
  %230 = vmatpush2.msra.mxu0 %v168
  %231 = vmatprep.subr.mxu0 0.0
  %232 = vmatpush2.msra.mxu0 %v167
  %233 = vmatprep.subr.mxu0 0.0
  %234 = vmatpush2.msra.mxu0 %v166
  %235 = vmatprep.subr.mxu0 0.0
  %236 = vmatpush2.msra.mxu0 %v165
  %237 = vmatprep.subr.mxu0 0.0
  %238 = vmatpush2.msra.mxu0 %v164
  %239 = vmatprep.subr.mxu0 0.0
  %240 = vmatpush2.msra.mxu0 %v163
  %241 = vmatprep.subr.mxu0 0.0
  %242 = vmatpush2.msra.mxu0 %v162
  %243 = vmatprep.subr.mxu0 0.0
  %244 = vmatpush2.msra.mxu0 %v161
  %245 = vmatprep.subr.mxu0 0.0
  %246 = vmatpush2.msra.mxu0 %v160
  %247 = vmatprep.mubr.f32.mxu0 %v143
  %248 = vmatmul.mubr.f32.gmra.mxu0 %v142
  %v249 = vpop.f32.mrf.mxu0
  %v250 = vadd.f32 %v181, %v249
  %v251 = vpop.f32.mrf.mxu0
  %252 = vdwg.mxu0
  %v253 = vadd.f32 %v26, %v250
  %v254 = vlaneseq
  %v255 = vand.u32 %v254, 127
  %256 = vrot.lane.b32.xlu0 %v253, 16
  %v257 = vpop.permute.xlu0 %256
  %258 = vrot.lane.b32.xlu0 %v253, 112
  %v259 = vpop.permute.xlu0 %258
  %v260 = vand.u32 %v255, 16
  %vm261 = vcmp.ne.s32.totalorder %v260, 0
  %v262 = vsel %vm261, %v257, %v259
  %v263 = vadd.f32 %v253, %v262
  %264 = vrot.lane.b32.xlu0 %v263, 8
  %v265 = vpop.permute.xlu0 %264
  %266 = vrot.lane.b32.xlu0 %v263, 120
  %v267 = vpop.permute.xlu0 %266
  %v268 = vand.u32 %v255, 8
  %vm269 = vcmp.ne.s32.totalorder %v268, 0
  %v270 = vsel %vm269, %v265, %v267
  %v271 = vadd.f32 %v263, %v270
  %272 = vrot.lane.b32.xlu0 %v271, 4
  %v273 = vpop.permute.xlu0 %272
  %274 = vrot.lane.b32.xlu0 %v271, 124
  %v275 = vpop.permute.xlu0 %274
  %v276 = vand.u32 %v255, 4
  %vm277 = vcmp.ne.s32.totalorder %v276, 0
  %v278 = vsel %vm277, %v273, %v275
  %v279 = vadd.f32 %v271, %v278
  %280 = vrot.lane.b32.xlu0 %v279, 2
  %v281 = vpop.permute.xlu0 %280
  %282 = vrot.lane.b32.xlu0 %v279, 126
  %v283 = vpop.permute.xlu0 %282
  %v284 = vand.u32 %v255, 2
  %vm285 = vcmp.ne.s32.totalorder %v284, 0
  %v286 = vsel %vm285, %v281, %v283
  %v287 = vadd.f32 %v279, %v286
  %288 = vrot.lane.b32.xlu0 %v287, 1
  %v289 = vpop.permute.xlu0 %288
  %290 = vrot.lane.b32.xlu0 %v287, 127
  %v291 = vpop.permute.xlu0 %290
  %v292 = vand.u32 %v255, 1
  %vm293 = vcmp.ne.s32.totalorder %v292, 0
  %v294 = vsel %vm293, %v289, %v291
  %v295 = vadd.f32 %v287, %v294
  %v296 = vmul.f32 %v295, 0.03125
  %v297 = vsub.f32 %v253, %v296
  %v298 = vmul.f32 %v297, %v297
  %299 = vrot.lane.b32.xlu0 %v298, 16
  %v300 = vpop.permute.xlu0 %299
  %301 = vrot.lane.b32.xlu0 %v298, 112
  %v302 = vpop.permute.xlu0 %301
  %v303 = vsel %vm261, %v300, %v302
  %v304 = vadd.f32 %v298, %v303
  %305 = vrot.lane.b32.xlu0 %v304, 8
  %v306 = vpop.permute.xlu0 %305
  %307 = vrot.lane.b32.xlu0 %v304, 120
  %v308 = vpop.permute.xlu0 %307
  %v309 = vsel %vm269, %v306, %v308
  %v310 = vadd.f32 %v304, %v309
  %311 = vrot.lane.b32.xlu0 %v310, 4
  %v312 = vpop.permute.xlu0 %311
  %313 = vrot.lane.b32.xlu0 %v310, 124
  %v314 = vpop.permute.xlu0 %313
  %v315 = vsel %vm277, %v312, %v314
  %v316 = vadd.f32 %v310, %v315
  %317 = vrot.lane.b32.xlu0 %v316, 2
  %v318 = vpop.permute.xlu0 %317
  %319 = vrot.lane.b32.xlu0 %v316, 126
  %v320 = vpop.permute.xlu0 %319
  %v321 = vsel %vm285, %v318, %v320
  %v322 = vadd.f32 %v316, %v321
  %323 = vrot.lane.b32.xlu0 %v322, 1
  %v324 = vpop.permute.xlu0 %323
  %325 = vrot.lane.b32.xlu0 %v322, 127
  %v326 = vpop.permute.xlu0 %325
  %v327 = vsel %vm293, %v324, %v326
  %v328 = vadd.f32 %v322, %v327
  %v329 = vmul.f32 %v328, 0.03125
  %v330 = vadd.f32 %v329, 1e-05
  %v331 = vrsqrt.pop %v330
  %v332 = vmul.f32 %v297, %v331
  %v333 = vld [vmem:[%s5] sm:$0x1]
  %v335 = vlaneseq
  %v336 = vshrl.u32 %v335, 7
  %v337 = vsub.s32 0, %v336
  %v338 = vrot.slane %v333, %v337
  %v340 = vmul.f32 %v332, %v338
  %v341 = vld [vmem:[%s6] sm:$0x1]
  %v343 = vlaneseq
  %v344 = vshrl.u32 %v343, 7
  %v345 = vsub.s32 0, %v344
  %v346 = vrot.slane %v341, %v345
  %v348 = vadd.f32 %v340, %v346
  %349 = vst [vmem:[%s7] sm:$0xff] %v348
  // Predicated region
  $region30: #{linres.1} parent=0 // pred_check
    _
  $region31: #{linres.1} parent=0 // pred_check_branch
    %351 = sbr.rel (0) target = $region33
  $region32: #{linres.1} parent=0 // pred_region
    _
  $region33: #{linres.1} parent=0 // pred_fallthru
    _
  // Predicated region
  $region34: #{linres.1} parent=0 // pred_check
    _
  $region35: #{linres.1} parent=0 // pred_check_branch
    %353 = sbr.rel (0) target = $region37
  $region36: #{linres.1} parent=0 // pred_region
    _
  $region37: #{linres.1} parent=0 // pred_fallthru
    _

</llo_original>
